<compile_context>
chip_gen: v5e
topology: v5e:2x2
jax: 0.10.0
libtpu: 0.0.40
codegen_flags: <defaults>
</compile_context>

<pallas_src>
import jax
import jax.numpy as jnp
from jax import lax
from jax.experimental import pallas as pl
from jax.experimental.pallas import tpu as pltpu

ALPHA = 1.0
C_OUT = 1.0

# Largest batch tile (lanes) per grid step.  ~1 KiB of live f32 intermediates
# per lane (L: 2H rows, H1/G/H2: H rows each at H=32) -> ~8 MiB at 8192 lanes.
_MAX_TILE_B = 8192


def _elu_like(L):
    # ELU branch of: relu(L) - relu(-alpha * (exp(L) - 1))
    #   L > 0  -> L
    #   L <= 0 -> alpha * (exp(L) - 1)
    # exp argument clamped so large positive pre-activations never hit +inf.
    return jnp.where(L > 0.0, L, ALPHA * (jnp.exp(jnp.minimum(L, 0.0)) - 1.0))


def mlp_elu_kernel(x_ref, w1G_ref, b1G_ref, w2_ref, b2_ref, w4_ref, b4_ref, o_ref):
    # x_ref: (tile_b, num_inputs) f32 ; weights torch-layout [out, in] bf16 ;
    # biases (out, 1) f32.  All intermediates keep batch on the lane axis.
    x = x_ref[...].astype(jnp.bfloat16)                       # (tile_b, ni)
    H = w2_ref.shape[0]

    # Fused fc1 + fcG, NT form: (2H, ni) . (tile_b, ni)^T -> (2H, tile_b)
    L = lax.dot_general(
        w1G_ref[...], x,
        dimension_numbers=(((1,), (1,)), ((), ())),
        preferred_element_type=jnp.float32) + b1G_ref[...]
    L1 = L[:H, :]                                             # fc1 pre-activation
    L3 = L[H:, :]                                             # fcG pre-activation

    # H1 = ELU-like(L1)
    H1 = _elu_like(L1)

    # G = sigmoid(L3) == 0.5 * (tanh(0.5 * L3) + 1)  -- single EUP op, exact.
    G = 0.5 * (jnp.tanh(0.5 * L3) + 1.0)

    # L2 = fc2(H1); H2 = ELU-like(L2)
    L2 = jnp.dot(w2_ref[...], H1.astype(jnp.bfloat16),
                 preferred_element_type=jnp.float32) + b2_ref[...]
    H2 = _elu_like(L2)

    # f_out = C_out * fc4(G * H2)   -> (2, tile_b), lane-dense stores.
    H2G = (G * H2).astype(jnp.bfloat16)                       # (H, tile_b)
    out = jnp.dot(w4_ref[...], H2G,
                  preferred_element_type=jnp.float32) + b4_ref[...]
    o_ref[...] = (C_OUT * out).astype(o_ref.dtype)


def _round_up(n, m):
    return ((n + m - 1) // m) * m


def mlp_elu_forward(x, packed_params, *, tile_b=None):
    """x: (B, num_inputs) f32.  Returns (B, 2) f32."""
    B, num_inputs = x.shape
    w1G, b1G, w2, b2, w4, b4 = packed_params
    twoH = w1G.shape[0]
    H = w2.shape[0]
    out_dim = w4.shape[0]

    if tile_b is None:
        if B <= _MAX_TILE_B:
            # Single grid step: block == full (unpadded) array.
            tile_b = B
            n_steps = 1
        else:
            # A few big steps; even count so the "parallel" axis shards across
            # both TensorCores on v7x.  tile_b stays a multiple of 128.
            n_steps = pl.cdiv(B, _MAX_TILE_B)
            n_steps = n_steps + (n_steps % 2)
            tile_b = _round_up(pl.cdiv(B, n_steps), 128)
    else:
        n_steps = pl.cdiv(B, tile_b)
        assert n_steps == 1 or tile_b % 128 == 0, "tile_b must be a multiple of 128"

    B_pad = tile_b * n_steps
    if B_pad != B:
        x = jnp.pad(x, ((0, B_pad - B), (0, 0)))

    const = lambda i: (0, 0)                        # resident weights / biases

    outT = pl.pallas_call(
        mlp_elu_kernel,
        out_shape=jax.ShapeDtypeStruct((out_dim, B_pad), jnp.float32),
        grid_spec=pl.GridSpec(
            grid=(n_steps,),
            in_specs=[
                pl.BlockSpec((tile_b, num_inputs), lambda i: (i, 0)),  # x (as given)
                pl.BlockSpec((twoH, num_inputs), const),               # fused w1|wG
                pl.BlockSpec((twoH, 1), const),                        # fused b1|bG
                pl.BlockSpec((H, H), const),                           # w2
                pl.BlockSpec((H, 1), const),                           # b2
                pl.BlockSpec((out_dim, H), const),                     # w4
                pl.BlockSpec((out_dim, 1), const),                     # b4
            ],
            out_specs=pl.BlockSpec((out_dim, tile_b), lambda i: (0, i)),
        ),
        compiler_params=pltpu.CompilerParams(
            dimension_semantics=("parallel",)),
    )(x, w1G, b1G, w2, b2, w4, b4)

    out = outT if B_pad == B else outT[:, :B]
    return out.T                                    # tiny (2, B) -> (B, 2)


def init_params(key, num_inputs, H):
    """Torch-layout params mimicking nn.Linear's uniform(-1/sqrt(fan_in), ...)."""
    ks = jax.random.split(key, 8)

    def linear(kw, kb, fan_in, fan_out):
        bound = 1.0 / jnp.sqrt(fan_in)
        w = jax.random.uniform(kw, (fan_out, fan_in), jnp.float32, -bound, bound)
        b = jax.random.uniform(kb, (fan_out, 1), jnp.float32, -bound, bound)
        return w, b

    w1, b1 = linear(ks[0], ks[1], num_inputs, H)   # fc1
    wG, bG = linear(ks[2], ks[3], num_inputs, H)   # fcG
    w2, b2 = linear(ks[4], ks[5], H, H)            # fc2
    w4, b4 = linear(ks[6], ks[7], H, 2)            # fc4
    return (w1, b1, wG, bG, w2, b2, w4, b4)


def pack_params(params):
    """Fuse fc1+fcG along the out dim and cast MXU operands to bf16 (biases f32)."""
    w1, b1, wG, bG, w2, b2, w4, b4 = params
    w1G = jnp.concatenate([w1, wG], axis=0).astype(jnp.bfloat16)   # (2H, num_inputs)
    b1G = jnp.concatenate([b1, bG], axis=0).astype(jnp.float32)    # (2H, 1)
    return (w1G, b1G,
            w2.astype(jnp.bfloat16), b2.astype(jnp.float32),
            w4.astype(jnp.bfloat16), b4.astype(jnp.float32))


def reference_forward(x, params):
    """Pure-JAX f32 reference matching the PyTorch forward exactly."""
    w1, b1, wG, bG, w2, b2, w4, b4 = params
    L1 = x @ w1.T + b1.T
    H1 = jnp.maximum(L1, 0) - jnp.maximum(-ALPHA * (jnp.exp(L1) - 1), 0)
    L2 = H1 @ w2.T + b2.T
    H2 = jnp.maximum(L2, 0) - jnp.maximum(-ALPHA * (jnp.exp(L2) - 1), 0)
    L3 = x @ wG.T + bG.T
    G = jax.nn.sigmoid(L3)
    return C_OUT * ((G * H2) @ w4.T + b4.T)


if __name__ == "__main__":
    key = jax.random.PRNGKey(0)
    k_x, k_p = jax.random.split(key)

    batch, num_inputs, H = 256, 16, 32
    x = jax.random.normal(k_x, (batch, num_inputs), jnp.float32)
    params = init_params(k_p, num_inputs, H)
    packed = pack_params(params)

    ref = reference_forward(x, params)

    # Default path: single grid step (block == full batch, no padding, no
    # wrapper-side transpose/cast of x).
    out = jax.block_until_ready(mlp_elu_forward(x, packed))
    assert out.shape == (batch, 2)
    # bf16 MXU operands -> loosened tolerance vs the f32 reference.
    assert jnp.allclose(out, ref, atol=5e-2, rtol=5e-2), "mismatch vs reference (single tile)"

    # Multi-step path (exercises grid > 1, same semantics).
    out_tiled = jax.block_until_ready(mlp_elu_forward(x, packed, tile_b=128))
    assert out_tiled.shape == (batch, 2)
    assert jnp.allclose(out_tiled, ref, atol=5e-2, rtol=5e-2), "mismatch vs reference (tiled)"

    print("KERNEL_OK")
</pallas_src>

<mosaic_0001>
module attributes {stable_mosaic.version = 11 : i64} {
  func.func @mlp_elu_kernel(%arg0: i32, %arg1: memref<256x16xf32, #tpu.memory_space<vmem>>, %arg2: memref<64x16xbf16, #tpu.memory_space<vmem>>, %arg3: memref<64x1xf32, #tpu.memory_space<vmem>>, %arg4: memref<32x32xbf16, #tpu.memory_space<vmem>>, %arg5: memref<32x1xf32, #tpu.memory_space<vmem>>, %arg6: memref<2x32xbf16, #tpu.memory_space<vmem>>, %arg7: memref<2x1xf32, #tpu.memory_space<vmem>>, %arg8: memref<2x256xf32, #tpu.memory_space<vmem>>) attributes {dimension_semantics = [#tpu.dimension_semantics<parallel>], iteration_bounds = array<i64: 1>, scalar_prefetch = 0 : i64, scratch_operands = 0 : i64, tpu.core_type = #tpu.core_type<tc>, window_params = [{transform_indices = @transform_0, window_bounds = array<i64: 256, 16>}, {pipeline_mode = #tpu.pipeline_mode<synchronous>, transform_indices = @transform_1, window_bounds = array<i64: 64, 16>}, {pipeline_mode = #tpu.pipeline_mode<synchronous>, transform_indices = @transform_2, window_bounds = array<i64: 64, 1>}, {pipeline_mode = #tpu.pipeline_mode<synchronous>, transform_indices = @transform_3, window_bounds = array<i64: 32, 32>}, {pipeline_mode = #tpu.pipeline_mode<synchronous>, transform_indices = @transform_4, window_bounds = array<i64: 32, 1>}, {pipeline_mode = #tpu.pipeline_mode<synchronous>, transform_indices = @transform_5, window_bounds = array<i64: 2, 32>}, {pipeline_mode = #tpu.pipeline_mode<synchronous>, transform_indices = @transform_6, window_bounds = array<i64: 2, 1>}, {transform_indices = @transform_7, window_bounds = array<i64: 2, 256>}]} {
    %c0 = arith.constant 0 : index
    %c0_0 = arith.constant 0 : index
    %0 = vector.load %arg1[%c0, %c0_0] : memref<256x16xf32, #tpu.memory_space<vmem>>, vector<256x16xf32>
    %1 = arith.truncf %0 : vector<256x16xf32> to vector<256x16xbf16>
    %c0_1 = arith.constant 0 : index
    %c0_2 = arith.constant 0 : index
    %2 = vector.load %arg2[%c0_1, %c0_2] : memref<64x16xbf16, #tpu.memory_space<vmem>>, vector<64x16xbf16>
    %cst = arith.constant dense<0.000000e+00> : vector<64x256xf32>
    %3 = tpu.matmul %2, %1, %cst {dimension_numbers = #tpu.dot_dimension_numbers<[1], [1], [0], [0], [0, 0, 1, 0], [], []>} : vector<64x16xbf16>, vector<256x16xbf16>, vector<64x256xf32> -> vector<64x256xf32>
    %c0_3 = arith.constant 0 : index
    %c0_4 = arith.constant 0 : index
    %4 = vector.load %arg3[%c0_3, %c0_4] : memref<64x1xf32, #tpu.memory_space<vmem>>, vector<64x1xf32>
    %5 = vector.broadcast %4 : vector<64x1xf32> to vector<64x256xf32>
    %6 = arith.addf %3, %5 : vector<64x256xf32>
    %7 = vector.extract_strided_slice %6 {offsets = [0, 0], sizes = [32, 256], strides = [1, 1]} : vector<64x256xf32> to vector<32x256xf32>
    %8 = vector.extract_strided_slice %6 {offsets = [32, 0], sizes = [32, 256], strides = [1, 1]} : vector<64x256xf32> to vector<32x256xf32>
    %cst_5 = arith.constant 0.000000e+00 : f32
    %9 = vector.broadcast %cst_5 : f32 to vector<32x256xf32>
    %10 = arith.cmpf ogt, %7, %9 : vector<32x256xf32>
    %cst_6 = arith.constant 0.000000e+00 : f32
    %11 = vector.broadcast %cst_6 : f32 to vector<32x256xf32>
    %12 = arith.minimumf %7, %11 : vector<32x256xf32>
    %13 = math.exp %12 : vector<32x256xf32>
    %cst_7 = arith.constant 1.000000e+00 : f32
    %14 = vector.broadcast %cst_7 : f32 to vector<32x256xf32>
    %15 = arith.subf %13, %14 : vector<32x256xf32>
    %cst_8 = arith.constant 1.000000e+00 : f32
    %16 = vector.broadcast %cst_8 : f32 to vector<32x256xf32>
    %17 = arith.mulf %16, %15 : vector<32x256xf32>
    %18 = arith.select %10, %7, %17 : vector<32x256xi1>, vector<32x256xf32>
    %cst_9 = arith.constant 5.000000e-01 : f32
    %19 = vector.broadcast %cst_9 : f32 to vector<32x256xf32>
    %20 = arith.mulf %19, %8 : vector<32x256xf32>
    %21 = math.tanh %20 : vector<32x256xf32>
    %cst_10 = arith.constant 1.000000e+00 : f32
    %22 = vector.broadcast %cst_10 : f32 to vector<32x256xf32>
    %23 = arith.addf %21, %22 : vector<32x256xf32>
    %cst_11 = arith.constant 5.000000e-01 : f32
    %24 = vector.broadcast %cst_11 : f32 to vector<32x256xf32>
    %25 = arith.mulf %24, %23 : vector<32x256xf32>
    %c0_12 = arith.constant 0 : index
    %c0_13 = arith.constant 0 : index
    %26 = vector.load %arg4[%c0_12, %c0_13] : memref<32x32xbf16, #tpu.memory_space<vmem>>, vector<32x32xbf16>
    %27 = arith.truncf %18 : vector<32x256xf32> to vector<32x256xbf16>
    %cst_14 = arith.constant dense<0.000000e+00> : vector<32x256xf32>
    %28 = tpu.matmul %26, %27, %cst_14 {dimension_numbers = #tpu.dot_dimension_numbers<[1], [0], [0], [1], [0, 0, 1, 1], [], []>} : vector<32x32xbf16>, vector<32x256xbf16>, vector<32x256xf32> -> vector<32x256xf32>
    %c0_15 = arith.constant 0 : index
    %c0_16 = arith.constant 0 : index
    %29 = vector.load %arg5[%c0_15, %c0_16] : memref<32x1xf32, #tpu.memory_space<vmem>>, vector<32x1xf32>
    %30 = vector.broadcast %29 : vector<32x1xf32> to vector<32x256xf32>
    %31 = arith.addf %28, %30 : vector<32x256xf32>
    %cst_17 = arith.constant 0.000000e+00 : f32
    %32 = vector.broadcast %cst_17 : f32 to vector<32x256xf32>
    %33 = arith.cmpf ogt, %31, %32 : vector<32x256xf32>
    %cst_18 = arith.constant 0.000000e+00 : f32
    %34 = vector.broadcast %cst_18 : f32 to vector<32x256xf32>
    %35 = arith.minimumf %31, %34 : vector<32x256xf32>
    %36 = math.exp %35 : vector<32x256xf32>
    %cst_19 = arith.constant 1.000000e+00 : f32
    %37 = vector.broadcast %cst_19 : f32 to vector<32x256xf32>
    %38 = arith.subf %36, %37 : vector<32x256xf32>
    %cst_20 = arith.constant 1.000000e+00 : f32
    %39 = vector.broadcast %cst_20 : f32 to vector<32x256xf32>
    %40 = arith.mulf %39, %38 : vector<32x256xf32>
    %41 = arith.select %33, %31, %40 : vector<32x256xi1>, vector<32x256xf32>
    %42 = arith.mulf %25, %41 : vector<32x256xf32>
    %43 = arith.truncf %42 : vector<32x256xf32> to vector<32x256xbf16>
    %c0_21 = arith.constant 0 : index
    %c0_22 = arith.constant 0 : index
    %44 = vector.load %arg6[%c0_21, %c0_22] : memref<2x32xbf16, #tpu.memory_space<vmem>>, vector<2x32xbf16>
    %cst_23 = arith.constant dense<0.000000e+00> : vector<2x256xf32>
    %45 = tpu.matmul %44, %43, %cst_23 {dimension_numbers = #tpu.dot_dimension_numbers<[1], [0], [0], [1], [0, 0, 1, 1], [], []>} : vector<2x32xbf16>, vector<32x256xbf16>, vector<2x256xf32> -> vector<2x256xf32>
    %c0_24 = arith.constant 0 : index
    %c0_25 = arith.constant 0 : index
    %46 = vector.load %arg7[%c0_24, %c0_25] : memref<2x1xf32, #tpu.memory_space<vmem>>, vector<2x1xf32>
    %47 = vector.broadcast %46 : vector<2x1xf32> to vector<2x256xf32>
    %48 = arith.addf %45, %47 : vector<2x256xf32>
    %cst_26 = arith.constant 1.000000e+00 : f32
    %49 = vector.broadcast %cst_26 : f32 to vector<2x256xf32>
    %50 = arith.mulf %49, %48 : vector<2x256xf32>
    %c0_27 = arith.constant 0 : index
    %c0_28 = arith.constant 0 : index
    %51 = vector.load %arg8[%c0_27, %c0_28] : memref<2x256xf32, #tpu.memory_space<vmem>>, vector<2x256xf32>
    tpu.vector_store %arg8[%c0_27, %c0_28], %50 {strides = array<i32>} : memref<2x256xf32, #tpu.memory_space<vmem>>, vector<2x256xf32>,
    return
  }
  func.func @transform_0(%arg0: i32) -> (i32, i32) {
    %c0_i32 = arith.constant 0 : i32
    %c0_i32_0 = arith.constant 0 : i32
    return %arg0, %c0_i32 : i32, i32
  }
  func.func @transform_1(%arg0: i32) -> (i32, i32) {
    %c0_i32 = arith.constant 0 : i32
    %c0_i32_0 = arith.constant 0 : i32
    %c0_i32_1 = arith.constant 0 : i32
    return %c0_i32, %c0_i32_0 : i32, i32
  }
  func.func @transform_2(%arg0: i32) -> (i32, i32) {
    %c0_i32 = arith.constant 0 : i32
    %c0_i32_0 = arith.constant 0 : i32
    %c0_i32_1 = arith.constant 0 : i32
    return %c0_i32, %c0_i32_0 : i32, i32
  }
  func.func @transform_3(%arg0: i32) -> (i32, i32) {
    %c0_i32 = arith.constant 0 : i32
    %c0_i32_0 = arith.constant 0 : i32
    %c0_i32_1 = arith.constant 0 : i32
    return %c0_i32, %c0_i32_0 : i32, i32
  }
  func.func @transform_4(%arg0: i32) -> (i32, i32) {
    %c0_i32 = arith.constant 0 : i32
    %c0_i32_0 = arith.constant 0 : i32
    %c0_i32_1 = arith.constant 0 : i32
    return %c0_i32, %c0_i32_0 : i32, i32
  }
  func.func @transform_5(%arg0: i32) -> (i32, i32) {
    %c0_i32 = arith.constant 0 : i32
    %c0_i32_0 = arith.constant 0 : i32
    %c0_i32_1 = arith.constant 0 : i32
    return %c0_i32, %c0_i32_0 : i32, i32
  }
  func.func @transform_6(%arg0: i32) -> (i32, i32) {
    %c0_i32 = arith.constant 0 : i32
    %c0_i32_0 = arith.constant 0 : i32
    %c0_i32_1 = arith.constant 0 : i32
    return %c0_i32, %c0_i32_0 : i32, i32
  }
  func.func @transform_7(%arg0: i32) -> (i32, i32) {
    %c0_i32 = arith.constant 0 : i32
    %c0_i32_0 = arith.constant 0 : i32
    return %c0_i32, %arg0 : i32, i32
  }
}

</mosaic_0001>

<llo_original>
// kernel: tpu_custom_call.1
$region0: #{tpu_custom_call.1}
  #allocation0 [shape = 'u32[]', space=smem, size = 0x4, offset = 0x4, fixed_abs, tag = 'smem constant byte address 0x4 - core index']
  #allocation1 [shape = 'u32[72,128]{1,0:T(1,128)}', space=vmem, size = 0x9000, scoped, tag = 'internal scratch']
  %s0 = inlined_call_operand.vmem [shape: f32[256,16], index: 0, kind: input, shape index: {}]
  %s1 = inlined_call_operand.vmem [shape: bf16[64,16], index: 1, kind: input, shape index: {}]
  %s2 = inlined_call_operand.vmem [shape: f32[64,1], index: 2, kind: input, shape index: {}]
  %s3 = inlined_call_operand.vmem [shape: bf16[32,32], index: 3, kind: input, shape index: {}]
  %s4 = inlined_call_operand.vmem [shape: f32[32,1], index: 4, kind: input, shape index: {}]
  %s5 = inlined_call_operand.vmem [shape: bf16[2,32], index: 5, kind: input, shape index: {}]
  %s6 = inlined_call_operand.vmem [shape: f32[2,1], index: 6, kind: input, shape index: {}]
  %s7 = inlined_call_operand.hbm [shape: f32[2,256], index: 7, kind: output, shape index: {}]
  %s8 = sld [smem:[#allocation0]]
  $region38: #{tpu_custom_call.1} parent=0
    _
  %s10 = ssub.s32 1, %s8
  %s11 = scalar_select 0, %s10, %s8
  $region1: #{tpu_custom_call.1} parent=0
    #allocation2 [shape = 'u8[2048]{0}', space=vmem, size = 0x800, scoped, tag = 'output window, operand 0, single buffered']
    #allocation3 [shape = 's32[1]{0}', space=sflag, size = 0x4, scoped, tag = 'scoped memory for tpu_custom_call.1']
    %12 = vsyncpa [#allocation3], 0
    // Predicated region
    $region2: #{tpu_custom_call.1} parent=1 // pred_check
      _
    $region3: #{tpu_custom_call.1} parent=1 // pred_check_branch
      %14 = sbr.rel (0) target = $region5
    $region4: #{tpu_custom_call.1} parent=1 // pred_region
      _
    $region5: #{tpu_custom_call.1} parent=1 // pred_fallthru
      _
    // Predicated region
    $region6: #{tpu_custom_call.1} parent=1 // pred_check
      _
    $region7: #{tpu_custom_call.1} parent=1 // pred_check_branch
      %16 = sbr.rel (0) target = $region9
    $region8: #{tpu_custom_call.1} parent=1 // pred_region
      _
    $region9: #{tpu_custom_call.1} parent=1 // pred_fallthru
      _
    // Predicated region
    $region10: #{tpu_custom_call.1} parent=1 // pred_check
      _
    $region11: #{tpu_custom_call.1} parent=1 // pred_check_branch
      %18 = sbr.rel (0) target = $region13
    $region12: #{tpu_custom_call.1} parent=1 // pred_region
      _
    $region13: #{tpu_custom_call.1} parent=1 // pred_fallthru
      _
    // Predicated region
    $region14: #{tpu_custom_call.1} parent=1 // pred_check
      _
    $region15: #{tpu_custom_call.1} parent=1 // pred_check_branch
      %20 = sbr.rel (0) target = $region17
    $region16: #{tpu_custom_call.1} parent=1 // pred_region
      _
    $region17: #{tpu_custom_call.1} parent=1 // pred_fallthru
      _
    // Predicated region
    $region18: #{tpu_custom_call.1} parent=1 // pred_check
      _
    $region19: #{tpu_custom_call.1} parent=1 // pred_check_branch
      %22 = sbr.rel (0) target = $region21
    $region20: #{tpu_custom_call.1} parent=1 // pred_region
      _
    $region21: #{tpu_custom_call.1} parent=1 // pred_fallthru
      _
    // Predicated region
    $region22: #{tpu_custom_call.1} parent=1 // pred_check
      _
    $region23: #{tpu_custom_call.1} parent=1 // pred_check_branch
      %24 = sbr.rel (0) target = $region25
    $region24: #{tpu_custom_call.1} parent=1 // pred_region
      _
    $region25: #{tpu_custom_call.1} parent=1 // pred_fallthru
      _
    // Predicated region
    $region26: #{tpu_custom_call.1} parent=1 // pred_check
      _
    $region27: #{tpu_custom_call.1} parent=1 // pred_check_branch
      %26 = sbr.rel (0) target = $region29
    $region28: #{tpu_custom_call.1} parent=1 // pred_region
      _
    $region29: #{tpu_custom_call.1} parent=1 // pred_fallthru
      _
    %v28 = vld [vmem:[%s0] sm:$0xff]
    %v29 = vld [vmem:[%s0 + $0x8] sm:$0xff]
    %v30 = vld [vmem:[%s0 + $0x10] sm:$0xff]
    %v31 = vld [vmem:[%s0 + $0x18] sm:$0xff]
    %v32 = vld [vmem:[%s0 + $0x20] sm:$0xff]
    %v33 = vld [vmem:[%s0 + $0x28] sm:$0xff]
    %v34 = vld [vmem:[%s0 + $0x30] sm:$0xff]
    %v35 = vld [vmem:[%s0 + $0x38] sm:$0xff]
    %v36 = vld [vmem:[%s0 + $0x40] sm:$0xff]
    %v37 = vld [vmem:[%s0 + $0x48] sm:$0xff]
    %v38 = vld [vmem:[%s0 + $0x50] sm:$0xff]
    %v39 = vld [vmem:[%s0 + $0x58] sm:$0xff]
    %v40 = vld [vmem:[%s0 + $0x60] sm:$0xff]
    %v41 = vld [vmem:[%s0 + $0x68] sm:$0xff]
    %v42 = vld [vmem:[%s0 + $0x70] sm:$0xff]
    %v43 = vld [vmem:[%s0 + $0x78] sm:$0xff]
    %v44 = vld [vmem:[%s0 + $0x80] sm:$0xff]
    %v45 = vld [vmem:[%s0 + $0x88] sm:$0xff]
    %v46 = vld [vmem:[%s0 + $0x90] sm:$0xff]
    %v47 = vld [vmem:[%s0 + $0x98] sm:$0xff]
    %v48 = vld [vmem:[%s0 + $0xa0] sm:$0xff]
    %v49 = vld [vmem:[%s0 + $0xa8] sm:$0xff]
    %v50 = vld [vmem:[%s0 + $0xb0] sm:$0xff]
    %v51 = vld [vmem:[%s0 + $0xb8] sm:$0xff]
    %v52 = vld [vmem:[%s0 + $0xc0] sm:$0xff]
    %v53 = vld [vmem:[%s0 + $0xc8] sm:$0xff]
    %v54 = vld [vmem:[%s0 + $0xd0] sm:$0xff]
    %v55 = vld [vmem:[%s0 + $0xd8] sm:$0xff]
    %v56 = vld [vmem:[%s0 + $0xe0] sm:$0xff]
    %v57 = vld [vmem:[%s0 + $0xe8] sm:$0xff]
    %v58 = vld [vmem:[%s0 + $0xf0] sm:$0xff]
    %v59 = vld [vmem:[%s0 + $0xf8] sm:$0xff]
    %v60 = vpack.c.bf16 %v29, %v28
    %v61 = vpack.c.bf16 %v31, %v30
    %v62 = vpack.c.bf16 %v33, %v32
    %v63 = vpack.c.bf16 %v35, %v34
    %v64 = vpack.c.bf16 %v37, %v36
    %v65 = vpack.c.bf16 %v39, %v38
    %v66 = vpack.c.bf16 %v41, %v40
    %v67 = vpack.c.bf16 %v43, %v42
    %v68 = vpack.c.bf16 %v45, %v44
    %v69 = vpack.c.bf16 %v47, %v46
    %v70 = vpack.c.bf16 %v49, %v48
    %v71 = vpack.c.bf16 %v51, %v50
    %v72 = vpack.c.bf16 %v53, %v52
    %v73 = vpack.c.bf16 %v55, %v54
    %v74 = vpack.c.bf16 %v57, %v56
    %v75 = vpack.c.bf16 %v59, %v58
    %v76 = vld [vmem:[%s1] sm:$0xf]
    %v77 = vld [vmem:[%s1 + $0x4] sm:$0xf]
    %v78 = vld [vmem:[%s1 + $0x8] sm:$0xf]
    %v79 = vld [vmem:[%s1 + $0xc] sm:$0xf]
    %v80 = vld [vmem:[%s1 + $0x10] sm:$0xf]
    %v81 = vld [vmem:[%s1 + $0x14] sm:$0xf]
    %v82 = vld [vmem:[%s1 + $0x18] sm:$0xf]
    %v83 = vld [vmem:[%s1 + $0x1c] sm:$0xf]
    %v84 = vld [vmem:[%s2] sm:$0xff]
    %v85 = vld [vmem:[%s2 + $0x8] sm:$0xff]
    %v86 = vld [vmem:[%s2 + $0x10] sm:$0xff]
    %v87 = vld [vmem:[%s2 + $0x18] sm:$0xff]
    %v88 = vld [vmem:[%s2 + $0x20] sm:$0xff]
    %v89 = vld [vmem:[%s2 + $0x28] sm:$0xff]
    %v90 = vld [vmem:[%s2 + $0x30] sm:$0xff]
    %v91 = vld [vmem:[%s2 + $0x38] sm:$0xff]
    %93 = vset.pattern.permute.xlu0 0
    %94 = vperm.xlu0 %93, %v84
    %v95 = vpop.permute.xlu0 %94
    %98 = vset.pattern.permute.xlu0 0
    %99 = vperm.xlu0 %98, %v85
    %v100 = vpop.permute.xlu0 %99
    %103 = vset.pattern.permute.xlu0 0
    %104 = vperm.xlu0 %103, %v86
    %v105 = vpop.permute.xlu0 %104
    %108 = vset.pattern.permute.xlu0 0
    %109 = vperm.xlu0 %108, %v87
    %v110 = vpop.permute.xlu0 %109
    %113 = vset.pattern.permute.xlu0 0
    %114 = vperm.xlu0 %113, %v88
    %v115 = vpop.permute.xlu0 %114
    %118 = vset.pattern.permute.xlu0 0
    %119 = vperm.xlu0 %118, %v89
    %v120 = vpop.permute.xlu0 %119
    %123 = vset.pattern.permute.xlu0 0
    %124 = vperm.xlu0 %123, %v90
    %v125 = vpop.permute.xlu0 %124
    %128 = vset.pattern.permute.xlu0 0
    %129 = vperm.xlu0 %128, %v91
    %v130 = vpop.permute.xlu0 %129
    %v140 = vunpack.c.l.b16 %v76
    %v141 = vunpack.c.l.b16 %v77
    %v142 = vunpack.c.l.b16 %v78
    %v143 = vunpack.c.l.b16 %v79
    %v144 = vunpack.c.l.b16 %v80
    %v145 = vunpack.c.l.b16 %v81
    %v146 = vunpack.c.l.b16 %v82
    %v147 = vunpack.c.l.b16 %v83
    %v148 = vpack.c.b16 %v141, %v140
    %v149 = vpack.c.b16 %v143, %v142
    %v150 = vpack.c.b16 %v145, %v144
    %v151 = vpack.c.b16 %v147, %v146
    %vm152 = vcmask 130048
    %v154 = vsel %vm152, %v148, 0
    %v157 = vsel %vm152, %v149, 0
    %v160 = vsel %vm152, %v150, 0
    %v163 = vsel %vm152, %v151, 0
    %v166 = vsel %vm152, %v60, 0
    %v169 = vsel %vm152, %v61, 0
    %v172 = vsel %vm152, %v62, 0
    %v175 = vsel %vm152, %v63, 0
    %v178 = vsel %vm152, %v64, 0
    %v181 = vsel %vm152, %v65, 0
    %v184 = vsel %vm152, %v66, 0
    %v187 = vsel %vm152, %v67, 0
    %v190 = vsel %vm152, %v68, 0
    %v193 = vsel %vm152, %v69, 0
    %v196 = vsel %vm152, %v70, 0
    %v199 = vsel %vm152, %v71, 0
    %v202 = vsel %vm152, %v72, 0
    %v205 = vsel %vm152, %v73, 0
    %v208 = vsel %vm152, %v74, 0
    %v211 = vsel %vm152, %v75, 0
    %213 = vmatpush.bf16.xpose.msra.mxu0 %v187
    %214 = vmatpush.bf16.xpose.msra.mxu0 %v184
    %215 = vmatpush.bf16.xpose.msra.mxu0 %v181
    %216 = vmatpush.bf16.xpose.msra.mxu0 %v178
    %217 = vmatpush.bf16.xpose.msra.mxu0 %v175
    %218 = vmatpush.bf16.xpose.msra.mxu0 %v172
    %219 = vmatpush.bf16.xpose.msra.mxu0 %v169
    %220 = vmatpush.bf16.xpose.msra.mxu0 %v166
    %221 = vmatmul.bf16.gmra.mxu0 %v154
    %v222 = vpop.f32.mrf.mxu0
    %v223 = vadd.f32 %v95, %v222
    %v224 = vpop.f32.mrf.mxu0
    %v225 = vadd.f32 %v100, %v224
    %226 = vmatmul.bf16.gmra.mxu0 %v157
    %v227 = vpop.f32.mrf.mxu0
    %v228 = vadd.f32 %v105, %v227
    %v229 = vpop.f32.mrf.mxu0
    %v230 = vadd.f32 %v110, %v229
    %231 = vmatmul.bf16.gmra.mxu0 %v160
    %v232 = vpop.f32.mrf.mxu0
    %v233 = vadd.f32 %v115, %v232
    %v234 = vpop.f32.mrf.mxu0
    %v235 = vadd.f32 %v120, %v234
    %236 = vmatmul.bf16.gmra.mxu0 %v163
    %v237 = vpop.f32.mrf.mxu0
    %v238 = vadd.f32 %v125, %v237
    %v239 = vpop.f32.mrf.mxu0
    %v240 = vadd.f32 %v130, %v239
    %241 = vdwg.mxu0
    %242 = vmatpush.bf16.xpose.msra.mxu0 %v211
    %243 = vmatpush.bf16.xpose.msra.mxu0 %v208
    %244 = vmatpush.bf16.xpose.msra.mxu0 %v205
    %245 = vmatpush.bf16.xpose.msra.mxu0 %v202
    %246 = vmatpush.bf16.xpose.msra.mxu0 %v199
    %247 = vmatpush.bf16.xpose.msra.mxu0 %v196
    %248 = vmatpush.bf16.xpose.msra.mxu0 %v193
    %249 = vmatpush.bf16.xpose.msra.mxu0 %v190
    %250 = vmatmul.bf16.gmra.mxu0 %v154
    %v251 = vpop.f32.mrf.mxu0
    %v252 = vadd.f32 %v95, %v251
    %v253 = vpop.f32.mrf.mxu0
    %v254 = vadd.f32 %v100, %v253
    %255 = vmatmul.bf16.gmra.mxu0 %v157
    %v256 = vpop.f32.mrf.mxu0
    %v257 = vadd.f32 %v105, %v256
    %v258 = vpop.f32.mrf.mxu0
    %v259 = vadd.f32 %v110, %v258
    %260 = vmatmul.bf16.gmra.mxu0 %v160
    %v261 = vpop.f32.mrf.mxu0
    %v262 = vadd.f32 %v115, %v261
    %v263 = vpop.f32.mrf.mxu0
    %v264 = vadd.f32 %v120, %v263
    %265 = vmatmul.bf16.gmra.mxu0 %v163
    %v266 = vpop.f32.mrf.mxu0
    %v267 = vadd.f32 %v125, %v266
    %v268 = vpop.f32.mrf.mxu0
    %v269 = vadd.f32 %v130, %v268
    %270 = vdwg.mxu0
    %vm271 = vcmp.gt.f32.partialorder %v223, 0.0
    %vm272 = vcmp.gt.f32.partialorder %v252, 0.0
    %vm273 = vcmp.gt.f32.partialorder %v225, 0.0
    %vm274 = vcmp.gt.f32.partialorder %v254, 0.0
    %vm275 = vcmp.gt.f32.partialorder %v228, 0.0
    %vm276 = vcmp.gt.f32.partialorder %v257, 0.0
    %vm277 = vcmp.gt.f32.partialorder %v230, 0.0
    %vm278 = vcmp.gt.f32.partialorder %v259, 0.0
    %v279 = vmin.f32 %v223, 0.0
    %v280 = vmin.f32 %v252, 0.0
    %v281 = vmin.f32 %v225, 0.0
    %v282 = vmin.f32 %v254, 0.0
    %v283 = vmin.f32 %v228, 0.0
    %v284 = vmin.f32 %v257, 0.0
    %v285 = vmin.f32 %v230, 0.0
    %v286 = vmin.f32 %v259, 0.0
    %v287 = vmul.f32 %v279, 1.442695
    %v288 = vpow.pop %v287
    %v289 = vmul.f32 %v280, 1.442695
    %v290 = vpow.pop %v289
    %v291 = vmul.f32 %v281, 1.442695
    %v292 = vpow.pop %v291
    %v293 = vmul.f32 %v282, 1.442695
    %v294 = vpow.pop %v293
    %v295 = vmul.f32 %v283, 1.442695
    %v296 = vpow.pop %v295
    %v297 = vmul.f32 %v284, 1.442695
    %v298 = vpow.pop %v297
    %v299 = vmul.f32 %v285, 1.442695
    %v300 = vpow.pop %v299
    %v301 = vmul.f32 %v286, 1.442695
    %v302 = vpow.pop %v301
    %v303 = vsub.f32 %v288, 1.0
    %v304 = vsub.f32 %v290, 1.0
    %v305 = vsub.f32 %v292, 1.0
    %v306 = vsub.f32 %v294, 1.0
    %v307 = vsub.f32 %v296, 1.0
    %v308 = vsub.f32 %v298, 1.0
    %v309 = vsub.f32 %v300, 1.0
    %v310 = vsub.f32 %v302, 1.0
    %v311 = vsel %vm271, %v223, %v303
    %v312 = vsel %vm272, %v252, %v304
    %v313 = vsel %vm273, %v225, %v305
    %v314 = vsel %vm274, %v254, %v306
    %v315 = vsel %vm275, %v228, %v307
    %v316 = vsel %vm276, %v257, %v308
    %v317 = vsel %vm277, %v230, %v309
    %v318 = vsel %vm278, %v259, %v310
    %v319 = vmul.f32 %v233, 0.5
    %v320 = vmul.f32 %v262, 0.5
    %v321 = vmul.f32 %v235, 0.5
    %v322 = vmul.f32 %v264, 0.5
    %v323 = vmul.f32 %v238, 0.5
    %v324 = vmul.f32 %v267, 0.5
    %v325 = vmul.f32 %v240, 0.5
    %v326 = vmul.f32 %v269, 0.5
    %v327 = vtanh.pop %v319
    %v328 = vtanh.pop %v320
    %v329 = vtanh.pop %v321
    %v330 = vtanh.pop %v322
    %v331 = vtanh.pop %v323
    %v332 = vtanh.pop %v324
    %v333 = vtanh.pop %v325
    %v334 = vtanh.pop %v326
    %v335 = vadd.f32 %v327, 1.0
    %v336 = vadd.f32 %v328, 1.0
    %v337 = vadd.f32 %v329, 1.0
    %v338 = vadd.f32 %v330, 1.0
    %v339 = vadd.f32 %v331, 1.0
    %v340 = vadd.f32 %v332, 1.0
    %v341 = vadd.f32 %v333, 1.0
    %v342 = vadd.f32 %v334, 1.0
    %v343 = vmul.f32 %v335, 0.5
    %v344 = vmul.f32 %v336, 0.5
    %v345 = vmul.f32 %v337, 0.5
    %v346 = vmul.f32 %v338, 0.5
    %v347 = vmul.f32 %v339, 0.5
    %v348 = vmul.f32 %v340, 0.5
    %v349 = vmul.f32 %v341, 0.5
    %v350 = vmul.f32 %v342, 0.5
    %v351 = vld [vmem:[%s3] sm:$0xf]
    %v352 = vld [vmem:[%s3 + $0x4] sm:$0xf]
    %v353 = vld [vmem:[%s3 + $0x8] sm:$0xf]
    %v354 = vld [vmem:[%s3 + $0xc] sm:$0xf]
    %v355 = vpack.c.bf16 %v313, %v311
    %v356 = vpack.c.bf16 %v314, %v312
    %v357 = vpack.c.bf16 %v317, %v315
    %v358 = vpack.c.bf16 %v318, %v316
    %v359 = vld [vmem:[%s4] sm:$0xff]
    %v360 = vld [vmem:[%s4 + $0x8] sm:$0xff]
    %v361 = vld [vmem:[%s4 + $0x10] sm:$0xff]
    %v362 = vld [vmem:[%s4 + $0x18] sm:$0xff]
    %364 = vset.pattern.permute.xlu0 0
    %365 = vperm.xlu0 %364, %v359
    %v366 = vpop.permute.xlu0 %365
    %369 = vset.pattern.permute.xlu0 0
    %370 = vperm.xlu0 %369, %v360
    %v371 = vpop.permute.xlu0 %370
    %374 = vset.pattern.permute.xlu0 0
    %375 = vperm.xlu0 %374, %v361
    %v376 = vpop.permute.xlu0 %375
    %379 = vset.pattern.permute.xlu0 0
    %380 = vperm.xlu0 %379, %v362
    %v381 = vpop.permute.xlu0 %380
    %v387 = vunpack.c.l.b16 %v351
    %v388 = vunpack.c.l.b16 %v352
    %v389 = vunpack.c.l.b16 %v353
    %v390 = vunpack.c.l.b16 %v354
    %v391 = vpack.c.b16 %v388, %v387
    %v392 = vpack.c.b16 %v390, %v389
    %vm393 = vcmask 261120
    %v395 = vsel %vm393, %v391, 0
    %v398 = vsel %vm393, %v392, 0
    %400 = vmatpush.bf16.msra.mxu0 0
    %401 = vmatpush.bf16.msra.mxu0 0
    %402 = vmatpush.bf16.msra.mxu0 0
    %403 = vmatpush.bf16.msra.mxu0 0
    %404 = vmatpush.bf16.msra.mxu0 0
    %405 = vmatpush.bf16.msra.mxu0 0
    %406 = vmatpush.bf16.msra.mxu0 %v357
    %407 = vmatpush.bf16.msra.mxu0 %v355
    %408 = vmatmul.bf16.gmra.mxu0 %v395
    %v409 = vpop.f32.mrf.mxu0
    %v410 = vadd.f32 %v366, %v409
    %v411 = vpop.f32.mrf.mxu0
    %v412 = vadd.f32 %v371, %v411
    %413 = vmatmul.bf16.gmra.mxu0 %v398
    %v414 = vpop.f32.mrf.mxu0
    %v415 = vadd.f32 %v376, %v414
    %v416 = vpop.f32.mrf.mxu0
    %v417 = vadd.f32 %v381, %v416
    %418 = vdwg.mxu0
    %419 = vmatpush.bf16.msra.mxu0 0
    %420 = vmatpush.bf16.msra.mxu0 0
    %421 = vmatpush.bf16.msra.mxu0 0
    %422 = vmatpush.bf16.msra.mxu0 0
    %423 = vmatpush.bf16.msra.mxu0 0
    %424 = vmatpush.bf16.msra.mxu0 0
    %425 = vmatpush.bf16.msra.mxu0 %v358
    %426 = vmatpush.bf16.msra.mxu0 %v356
    %427 = vmatmul.bf16.gmra.mxu0 %v395
    %v428 = vpop.f32.mrf.mxu0
    %v429 = vadd.f32 %v366, %v428
    %v430 = vpop.f32.mrf.mxu0
    %v431 = vadd.f32 %v371, %v430
    %432 = vmatmul.bf16.gmra.mxu0 %v398
    %v433 = vpop.f32.mrf.mxu0
    %v434 = vadd.f32 %v376, %v433
    %v435 = vpop.f32.mrf.mxu0
    %v436 = vadd.f32 %v381, %v435
    %437 = vdwg.mxu0
    %vm438 = vcmp.gt.f32.partialorder %v410, 0.0
    %vm439 = vcmp.gt.f32.partialorder %v429, 0.0
    %vm440 = vcmp.gt.f32.partialorder %v412, 0.0
    %vm441 = vcmp.gt.f32.partialorder %v431, 0.0
    %vm442 = vcmp.gt.f32.partialorder %v415, 0.0
    %vm443 = vcmp.gt.f32.partialorder %v434, 0.0
    %vm444 = vcmp.gt.f32.partialorder %v417, 0.0
    %vm445 = vcmp.gt.f32.partialorder %v436, 0.0
    %v446 = vmin.f32 %v410, 0.0
    %v447 = vmin.f32 %v429, 0.0
    %v448 = vmin.f32 %v412, 0.0
    %v449 = vmin.f32 %v431, 0.0
    %v450 = vmin.f32 %v415, 0.0
    %v451 = vmin.f32 %v434, 0.0
    %v452 = vmin.f32 %v417, 0.0
    %v453 = vmin.f32 %v436, 0.0
    %v454 = vmul.f32 %v446, 1.442695
    %v455 = vpow.pop %v454
    %v456 = vmul.f32 %v447, 1.442695
    %v457 = vpow.pop %v456
    %v458 = vmul.f32 %v448, 1.442695
    %v459 = vpow.pop %v458
    %v460 = vmul.f32 %v449, 1.442695
    %v461 = vpow.pop %v460
    %v462 = vmul.f32 %v450, 1.442695
    %v463 = vpow.pop %v462
    %v464 = vmul.f32 %v451, 1.442695
    %v465 = vpow.pop %v464
    %v466 = vmul.f32 %v452, 1.442695
    %v467 = vpow.pop %v466
    %v468 = vmul.f32 %v453, 1.442695
    %v469 = vpow.pop %v468
    %v470 = vsub.f32 %v455, 1.0
    %v471 = vsub.f32 %v457, 1.0
    %v472 = vsub.f32 %v459, 1.0
    %v473 = vsub.f32 %v461, 1.0
    %v474 = vsub.f32 %v463, 1.0
    %v475 = vsub.f32 %v465, 1.0
    %v476 = vsub.f32 %v467, 1.0
    %v477 = vsub.f32 %v469, 1.0
    %v478 = vsel %vm438, %v410, %v470
    %v479 = vsel %vm439, %v429, %v471
    %v480 = vsel %vm440, %v412, %v472
    %v481 = vsel %vm441, %v431, %v473
    %v482 = vsel %vm442, %v415, %v474
    %v483 = vsel %vm443, %v434, %v475
    %v484 = vsel %vm444, %v417, %v476
    %v485 = vsel %vm445, %v436, %v477
    %v486 = vmul.f32 %v343, %v478
    %v487 = vmul.f32 %v344, %v479
    %v488 = vmul.f32 %v345, %v480
    %v489 = vmul.f32 %v346, %v481
    %v490 = vmul.f32 %v347, %v482
    %v491 = vmul.f32 %v348, %v483
    %v492 = vmul.f32 %v349, %v484
    %v493 = vmul.f32 %v350, %v485
    %v494 = vpack.c.bf16 %v488, %v486
    %v495 = vpack.c.bf16 %v489, %v487
    %v496 = vpack.c.bf16 %v492, %v490
    %v497 = vpack.c.bf16 %v493, %v491
    %v498 = vld [vmem:[%s5] sm:$0x1]
    %v499 = vld [vmem:[%s6] sm:$0x3]
    %501 = vset.pattern.permute.xlu0 0
    %502 = vperm.xlu0 %501, %v499
    %v503 = vpop.permute.xlu0 %502
    %v506 = vsel %vm393, %v498, 0
    %508 = vmatpush.bf16.msra.mxu0 0
    %509 = vmatpush.bf16.msra.mxu0 0
    %510 = vmatpush.bf16.msra.mxu0 0
    %511 = vmatpush.bf16.msra.mxu0 0
    %512 = vmatpush.bf16.msra.mxu0 0
    %513 = vmatpush.bf16.msra.mxu0 0
    %514 = vmatpush.bf16.msra.mxu0 %v496
    %515 = vmatpush.bf16.msra.mxu0 %v494
    %516 = vmatmul.bf16.gmra.mxu0 %v506
    %v517 = vpop.f32.mrf.mxu0
    %v518 = vadd.f32 %v503, %v517
    %v519 = vpop.f32.mrf.mxu0
    %520 = vdwg.mxu0
    %521 = vmatpush.bf16.msra.mxu0 0
    %522 = vmatpush.bf16.msra.mxu0 0
    %523 = vmatpush.bf16.msra.mxu0 0
    %524 = vmatpush.bf16.msra.mxu0 0
    %525 = vmatpush.bf16.msra.mxu0 0
    %526 = vmatpush.bf16.msra.mxu0 0
    %527 = vmatpush.bf16.msra.mxu0 %v497
    %528 = vmatpush.bf16.msra.mxu0 %v495
    %529 = vmatmul.bf16.gmra.mxu0 %v506
    %v530 = vpop.f32.mrf.mxu0
    %v531 = vadd.f32 %v503, %v530
    %v532 = vpop.f32.mrf.mxu0
    %533 = vdwg.mxu0
    %v536 = vrot.slane %v531, 6
    %vm537 = vcmask 1041408
    %v538 = vsel %vm537, %v518, %v536
    %540 = vst [vmem:[#allocation2] sm:$0xf] %v538
    // Predicated region
    $region30: #{tpu_custom_call.1} parent=1 // pred_check
      _
    $region31: #{tpu_custom_call.1} parent=1 // pred_check_branch
      %542 = sbr.rel (0) target = $region33
    $region32: #{tpu_custom_call.1} parent=1 // pred_region
      %544 = vsyncadd [#allocation3], 0
      %s546 = sshll.u32 [#allocation2], 4
      %s547 = int_to_ptr.vmem [resolvable:$true] %s546
      %s548 = sshll.u32 %s7, 4
      %s549 = int_to_ptr.hbm [resolvable:$true] %s548
      %551 = dma.vmem_to_hbm [thread:$0]  %s547, 64, %s549, [#allocation3]
    $region33: #{tpu_custom_call.1} parent=1 // pred_fallthru
      _
    // Predicated region
    $region34: #{tpu_custom_call.1} parent=1 // pred_check
      _
    $region35: #{tpu_custom_call.1} parent=1 // pred_check_branch
      %553 = sbr.rel (0) target = $region37
    $region36: #{tpu_custom_call.1} parent=1 // pred_region
      %555 = dma.done [#allocation3], 64
    $region37: #{tpu_custom_call.1} parent=1 // pred_fallthru
      _
    %556 = vsyncpa [#allocation3], 1

</llo_original>
